<compile_context>
chip_gen: v7x
topology: tpu7x:2x2x1
jax: 0.10.0
libtpu: 0.0.40
codegen_flags: <defaults>
</compile_context>

<pallas_src>
import jax
import jax.numpy as jnp
from jax.experimental import pallas as pl
from jax.experimental.pallas import tpu as pltpu


def _round_up(x, m):
    return ((x + m - 1) // m) * m


def _choose_tile(B, tile_b):
    """Sublane-aligned batch tile; keeps >=2 grid steps when B > 8 (v7x)."""
    tb = _round_up(min(int(tile_b), max(int(B), 1)), 8)
    if B > 8:
        half = _round_up(-(-B // 2), 8)
        tb = min(tb, half)
    return max(tb, 8)


def _const_idx(i):
    return (0, 0)


def _param_spec(shape):
    """Resident (constant block index) parameter spec, single-buffered."""
    try:
        return pl.BlockSpec(shape, _const_idx, pipeline_mode=pl.Buffered(1))
    except TypeError:
        # Older API without pipeline_mode: fall back to default buffering.
        return pl.BlockSpec(shape, _const_idx)


def _make_film_kernel(n_hidden):
    """Kernel computing the whole MLP (n_hidden ReLU layers + final linear)."""

    def kernel(*refs):
        cond_ref = refs[0]
        out_ref = refs[-1]
        params = refs[1:-1]          # w0, b0, w1, b1, ..., w_t, b_t

        x = cond_ref[...]            # keep native dtype -> native MXU path
        idx = 0
        for _ in range(n_hidden):
            w = params[idx][...]
            b = params[idx + 1][...].astype(jnp.float32)
            idx += 2
            y = jnp.dot(x, w, preferred_element_type=jnp.float32) + b
            y = jnp.maximum(y, 0.0)          # ReLU in f32
            x = y.astype(w.dtype)            # feed next matmul in param dtype
        w = params[idx][...]
        b = params[idx + 1][...].astype(jnp.float32)
        out = jnp.dot(x, w, preferred_element_type=jnp.float32) + b
        out_ref[...] = out.astype(out_ref.dtype)

    return kernel


def init_film_params(key, norm_nc, cond_nc, fc=1, fc_nc=64, dtype=jnp.float32):
    """Deterministic parameter init matching the module's __init__ shapes.

    Weights: uniform(-1/sqrt(fan_in), 1/sqrt(fan_in)) like torch.nn.Linear.
    Final layer bias: first norm_nc entries = 1, rest = 0 (as in __init__).
    Weights are stored as (in_features, out_features).
    """
    if fc == 1:
        layer_dims = [(cond_nc, norm_nc * 2)]
    elif fc == 3:
        layer_dims = [(cond_nc, fc_nc), (fc_nc, fc_nc), (fc_nc, norm_nc * 2)]
    elif fc == 5:
        layer_dims = [(cond_nc, fc_nc), (fc_nc, fc_nc), (fc_nc, fc_nc),
                      (fc_nc, fc_nc), (fc_nc, norm_nc * 2)]
    else:
        raise ValueError("fc must be 1, 3 or 5")

    params = []
    for li, (din, dout) in enumerate(layer_dims):
        key, kw, kb = jax.random.split(key, 3)
        bound = 1.0 / float(jnp.sqrt(jnp.float32(din)))
        w = jax.random.uniform(kw, (din, dout), dtype, -bound, bound)
        if li == len(layer_dims) - 1:
            # self.transform.bias.data[:norm_nc] = 1 ; [norm_nc:] = 0
            b = jnp.concatenate(
                [jnp.ones((norm_nc,), dtype), jnp.zeros((norm_nc,), dtype)]
            ).reshape(1, dout)
        else:
            b = jax.random.uniform(kb, (1, dout), dtype, -bound, bound)
        params.append((w, b))
    return params


def film_generator_forward(cond, params, norm_nc, *, tile_b=4096):
    """Runs the Pallas kernel; returns (factor, bias) of shape (B, norm_nc, 1, 1)."""
    B, cond_nc = cond.shape
    n_hidden = len(params) - 1
    out_dim = params[-1][0].shape[1]
    assert out_dim == 2 * norm_nc

    # --- batch tiling: sublane-aligned tile, ragged tail handled by Pallas ---
    tb = _choose_tile(B, tile_b)
    grid = (pl.cdiv(B, tb),)

    flat_params = []
    for w, b in params:
        flat_params += [w, b]

    # cond/out: tiled over batch (double-buffered pipeline);
    # weights/biases: constant block index -> resident, single-buffered.
    in_specs = [pl.BlockSpec((tb, cond_nc), lambda i: (i, 0))]
    for p in flat_params:
        in_specs.append(_param_spec(p.shape))
    out_spec = pl.BlockSpec((tb, out_dim), lambda i: (i, 0))

    # --- VMEM budget: resident params + double-buffered cond/out tiles + headroom ---
    itemsize = jnp.dtype(cond.dtype).itemsize
    param_bytes = sum(int(p.size) * jnp.dtype(p.dtype).itemsize for p in flat_params)
    io_bytes = 2 * tb * (cond_nc + out_dim) * itemsize     # 2x: double buffer
    vmem_limit = int(min(param_bytes + io_bytes + (2 << 20), 32 << 20))

    out = pl.pallas_call(
        _make_film_kernel(n_hidden),
        out_shape=jax.ShapeDtypeStruct((B, out_dim), cond.dtype),
        grid=grid,
        in_specs=in_specs,
        out_specs=out_spec,
        compiler_params=pltpu.CompilerParams(
            dimension_semantics=("parallel",),
            vmem_limit_bytes=vmem_limit),
    )(cond, *flat_params)

    # param.unsqueeze(2).unsqueeze(3) then chunk(2, dim=1): one reshape, two views.
    out5 = out.reshape(B, 2, norm_nc, 1, 1)
    factor = out5[:, 0]
    bias = out5[:, 1]
    return factor, bias


def _reference(cond, params):
    x = cond.astype(jnp.float32)
    for i, (w, b) in enumerate(params):
        x = x @ w.astype(jnp.float32) + b.astype(jnp.float32)
        if i < len(params) - 1:
            x = jnp.maximum(x, 0.0)
    return x


def _check(cond, params, norm_nc, tile_b, atol, rtol):
    B = cond.shape[0]
    factor, bias = film_generator_forward(cond, params, norm_nc, tile_b=tile_b)
    factor, bias = jax.block_until_ready((factor, bias))
    assert factor.shape == (B, norm_nc, 1, 1)
    assert bias.shape == (B, norm_nc, 1, 1)
    ref = _reference(cond, params)
    ref_factor = ref[:, :norm_nc].reshape(B, norm_nc, 1, 1)
    ref_bias = ref[:, norm_nc:].reshape(B, norm_nc, 1, 1)
    assert jnp.allclose(factor.astype(jnp.float32), ref_factor, atol=atol, rtol=rtol)
    assert jnp.allclose(bias.astype(jnp.float32), ref_bias, atol=atol, rtol=rtol)


if __name__ == "__main__":
    key = jax.random.PRNGKey(0)
    B, cond_nc, norm_nc, fc_nc = 2, 32, 4, 64

    # f32 path, all fc variants, tiny batch (single ragged tile, grid=1).
    for fc in (1, 3, 5):
        kk = jax.random.fold_in(key, fc)
        k_cond, k_params = jax.random.split(kk)
        cond = jax.random.normal(k_cond, (B, cond_nc), jnp.float32)
        params = init_film_params(k_params, norm_nc, cond_nc, fc=fc, fc_nc=fc_nc)
        _check(cond, params, norm_nc, tile_b=4096, atol=1e-5, rtol=1e-5)

    # f32 path, larger batch: multi-step grid + ragged tail block (no padding).
    k_cond, k_params = jax.random.split(jax.random.fold_in(key, 100))
    cond_big = jax.random.normal(k_cond, (300, cond_nc), jnp.float32)
    params_big = init_film_params(k_params, norm_nc, cond_nc, fc=3, fc_nc=fc_nc)
    _check(cond_big, params_big, norm_nc, tile_b=128, atol=1e-5, rtol=1e-5)
    _check(cond_big, params_big, norm_nc, tile_b=4096, atol=1e-5, rtol=1e-5)

    # bf16 path: native bf16 MXU with f32 accumulation (loose tolerance).
    k_cond, k_params = jax.random.split(jax.random.fold_in(key, 200))
    cond_bf = jax.random.normal(k_cond, (64, cond_nc), jnp.bfloat16)
    params_bf = init_film_params(k_params, norm_nc, cond_nc, fc=3, fc_nc=fc_nc,
                                 dtype=jnp.bfloat16)
    _check(cond_bf, params_bf, norm_nc, tile_b=4096, atol=5e-2, rtol=5e-2)

    print("KERNEL_OK")
</pallas_src>

<mosaic_0001>
module attributes {stable_mosaic.version = 11 : i64} {
  func.func @kernel(%arg0: i32, %arg1: memref<8x32xf32, #tpu.memory_space<vmem>>, %arg2: memref<32x8xf32, #tpu.memory_space<vmem>>, %arg3: memref<1x8xf32, #tpu.memory_space<vmem>>, %arg4: memref<8x8xf32, #tpu.memory_space<vmem>>) attributes {dimension_semantics = [#tpu.dimension_semantics<parallel>], iteration_bounds = array<i64: 1>, scalar_prefetch = 0 : i64, scratch_operands = 0 : i64, tpu.core_type = #tpu.core_type<tc>, window_params = [{transform_indices = @transform_0, window_bounds = array<i64: 8, 32>}, {pipeline_mode = #tpu.pipeline_mode<synchronous>, transform_indices = @transform_1, window_bounds = array<i64: 32, 8>}, {pipeline_mode = #tpu.pipeline_mode<synchronous>, transform_indices = @transform_2, window_bounds = array<i64: 1, 8>}, {transform_indices = @transform_3, window_bounds = array<i64: 8, 8>}]} {
    %c0 = arith.constant 0 : index
    %c0_0 = arith.constant 0 : index
    %0 = vector.load %arg1[%c0, %c0_0] : memref<8x32xf32, #tpu.memory_space<vmem>>, vector<8x32xf32>
    %c0_1 = arith.constant 0 : index
    %c0_2 = arith.constant 0 : index
    %1 = vector.load %arg2[%c0_1, %c0_2] : memref<32x8xf32, #tpu.memory_space<vmem>>, vector<32x8xf32>
    %c0_3 = arith.constant 0 : index
    %c0_4 = arith.constant 0 : index
    %2 = vector.load %arg3[%c0_3, %c0_4] : memref<1x8xf32, #tpu.memory_space<vmem>>, vector<1x8xf32>
    %cst = arith.constant dense<0.000000e+00> : vector<8x8xf32>
    %3 = tpu.matmul %0, %1, %cst {dimension_numbers = #tpu.dot_dimension_numbers<[1], [0], [0], [1], [0, 0, 1, 1], [], []>} : vector<8x32xf32>, vector<32x8xf32>, vector<8x8xf32> -> vector<8x8xf32>
    %4 = vector.broadcast %2 : vector<1x8xf32> to vector<8x8xf32>
    %5 = arith.addf %3, %4 : vector<8x8xf32>
    %c0_5 = arith.constant 0 : index
    %c0_6 = arith.constant 0 : index
    %6 = vector.load %arg4[%c0_5, %c0_6] : memref<8x8xf32, #tpu.memory_space<vmem>>, vector<8x8xf32>
    tpu.vector_store %arg4[%c0_5, %c0_6], %5 {strides = array<i32>} : memref<8x8xf32, #tpu.memory_space<vmem>>, vector<8x8xf32>,
    return
  }
  func.func @transform_0(%arg0: i32) -> (i32, i32) {
    %c0_i32 = arith.constant 0 : i32
    %c0_i32_0 = arith.constant 0 : i32
    return %arg0, %c0_i32 : i32, i32
  }
  func.func @transform_1(%arg0: i32) -> (i32, i32) {
    %c0_i32 = arith.constant 0 : i32
    %c0_i32_0 = arith.constant 0 : i32
    %c0_i32_1 = arith.constant 0 : i32
    return %c0_i32, %c0_i32_0 : i32, i32
  }
  func.func @transform_2(%arg0: i32) -> (i32, i32) {
    %c0_i32 = arith.constant 0 : i32
    %c0_i32_0 = arith.constant 0 : i32
    %c0_i32_1 = arith.constant 0 : i32
    return %c0_i32, %c0_i32_0 : i32, i32
  }
  func.func @transform_3(%arg0: i32) -> (i32, i32) {
    %c0_i32 = arith.constant 0 : i32
    %c0_i32_0 = arith.constant 0 : i32
    return %arg0, %c0_i32 : i32, i32
  }
}

</mosaic_0001>

<llo_original>
// kernel: tpu_custom_call.1
$region0: #{tpu_custom_call.1}
  #allocation0 [shape = 'u32[]', space=smem, size = 0x4, offset = 0x4, fixed_abs, tag = 'smem constant byte address 0x4 - core index']
  #allocation1 [shape = 'u32[144,128]{1,0:T(1,128)}', space=vmem, size = 0x12000, scoped, tag = 'internal scratch']
  %s0 = inlined_call_operand.vmem [shape: f32[2,32], index: 0, kind: input, shape index: {}]
  %s1 = inlined_call_operand.vmem [shape: f32[32,8], index: 1, kind: input, shape index: {}]
  %s2 = inlined_call_operand.vmem [shape: f32[1,8], index: 2, kind: input, shape index: {}]
  %s3 = inlined_call_operand.hbm [shape: f32[2,8], index: 3, kind: output, shape index: {}]
  %s4 = sld [smem:[#allocation0]]
  $region22: #{tpu_custom_call.1} parent=0
    _
  %s6 = ssub.s32 1, %s4
  %s7 = scalar_select 0, %s6, %s4
  $region1: #{tpu_custom_call.1} parent=0
    #allocation2 [shape = 'u8[4096]{0}', space=vmem, size = 0x1000, scoped, tag = 'output window, operand 0, single buffered']
    #allocation3 [shape = 's32[1]{0}', space=sflag, size = 0x4, scoped, tag = 'scoped memory for tpu_custom_call.1']
    %8 = vsyncpa [#allocation3], 0
    // Predicated region
    $region2: #{tpu_custom_call.1} parent=1 // pred_check
      _
    $region3: #{tpu_custom_call.1} parent=1 // pred_check_branch
      %10 = sbr.rel (0) target = $region5
    $region4: #{tpu_custom_call.1} parent=1 // pred_region
      _
    $region5: #{tpu_custom_call.1} parent=1 // pred_fallthru
      _
    // Predicated region
    $region6: #{tpu_custom_call.1} parent=1 // pred_check
      _
    $region7: #{tpu_custom_call.1} parent=1 // pred_check_branch
      %12 = sbr.rel (0) target = $region9
    $region8: #{tpu_custom_call.1} parent=1 // pred_region
      _
    $region9: #{tpu_custom_call.1} parent=1 // pred_fallthru
      _
    // Predicated region
    $region10: #{tpu_custom_call.1} parent=1 // pred_check
      _
    $region11: #{tpu_custom_call.1} parent=1 // pred_check_branch
      %14 = sbr.rel (0) target = $region13
    $region12: #{tpu_custom_call.1} parent=1 // pred_region
      _
    $region13: #{tpu_custom_call.1} parent=1 // pred_fallthru
      _
    %v15 = vld [vmem:[%s0] sm:$0xff]
    %v16 = vld [vmem:[%s1] sm:$0xff]
    %v17 = vld [vmem:[%s1 + $0x8] sm:$0xff]
    %v18 = vld [vmem:[%s1 + $0x10] sm:$0xff]
    %v19 = vld [vmem:[%s1 + $0x18] sm:$0xff]
    %v20 = vld [vmem:[%s2] sm:$0x1]
    %v22 = vlaneseq
    %v23 = vshrl.u32 %v22, 7
    %v24 = vsub.s32 0, %v23
    %v25 = vrot.slane %v20, %v24
    %vm27 = vcmask 261120
    %v29 = vsel %vm27, %v15, 0
    %31 = vmatprep.subr.mxu0 0.0
    %32 = vmatpush1.msra.mxu0 %v16
    %33 = vmatprep.subr.mxu0 0.0
    %34 = vmatpush1.msra.mxu0 %v17
    %35 = vmatprep.subr.mxu0 0.0
    %36 = vmatpush1.msra.mxu0 %v18
    %37 = vmatprep.subr.mxu0 0.0
    %38 = vmatpush1.msra.mxu0 %v19
    %39 = vmatprep.subr.mxu0 0.0
    %40 = vmatpush1.msra.mxu0 0.0
    %41 = vmatprep.subr.mxu0 0.0
    %42 = vmatpush1.msra.mxu0 0.0
    %43 = vmatprep.subr.mxu0 0.0
    %44 = vmatpush1.msra.mxu0 0.0
    %45 = vmatprep.subr.mxu0 0.0
    %46 = vmatpush1.msra.mxu0 0.0
    %47 = vmatprep.subr.mxu0 0.0
    %48 = vmatpush1.msra.mxu0 0.0
    %49 = vmatprep.subr.mxu0 0.0
    %50 = vmatpush1.msra.mxu0 0.0
    %51 = vmatprep.subr.mxu0 0.0
    %52 = vmatpush1.msra.mxu0 0.0
    %53 = vmatprep.subr.mxu0 0.0
    %54 = vmatpush1.msra.mxu0 0.0
    %55 = vmatprep.subr.mxu0 0.0
    %56 = vmatpush1.msra.mxu0 0.0
    %57 = vmatprep.subr.mxu0 0.0
    %58 = vmatpush1.msra.mxu0 0.0
    %59 = vmatprep.subr.mxu0 0.0
    %60 = vmatpush1.msra.mxu0 0.0
    %61 = vmatprep.subr.mxu0 0.0
    %62 = vmatpush1.msra.mxu0 0.0
    %63 = vmatprep.subr.mxu0 0.0
    %64 = vmatpush1.msra.mxu0 0.0
    %65 = vmatprep.subr.mxu0 0.0
    %66 = vmatpush1.msra.mxu0 0.0
    %67 = vmatprep.subr.mxu0 0.0
    %68 = vmatpush1.msra.mxu0 0.0
    %69 = vmatprep.subr.mxu0 0.0
    %70 = vmatpush1.msra.mxu0 0.0
    %71 = vmatprep.subr.mxu0 0.0
    %72 = vmatpush1.msra.mxu0 0.0
    %73 = vmatprep.subr.mxu0 0.0
    %74 = vmatpush1.msra.mxu0 0.0
    %75 = vmatprep.subr.mxu0 0.0
    %76 = vmatpush1.msra.mxu0 0.0
    %77 = vmatprep.subr.mxu0 0.0
    %78 = vmatpush1.msra.mxu0 0.0
    %79 = vmatprep.subr.mxu0 0.0
    %80 = vmatpush1.msra.mxu0 0.0
    %81 = vmatprep.subr.mxu0 0.0
    %82 = vmatpush1.msra.mxu0 0.0
    %83 = vmatprep.subr.mxu0 0.0
    %84 = vmatpush1.msra.mxu0 0.0
    %85 = vmatprep.subr.mxu0 0.0
    %86 = vmatpush1.msra.mxu0 0.0
    %87 = vmatprep.subr.mxu0 0.0
    %88 = vmatpush1.msra.mxu0 0.0
    %89 = vmatprep.subr.mxu0 0.0
    %90 = vmatpush1.msra.mxu0 0.0
    %91 = vmatprep.subr.mxu0 0.0
    %92 = vmatpush1.msra.mxu0 0.0
    %93 = vmatprep.subr.mxu0 0.0
    %94 = vmatpush1.msra.mxu0 0.0
    %95 = vmatprep.mubr.f32.mxu0 0.0
    %96 = vmatmul.mubr.f32.gmra.mrb[0].mxu0 %v29
    %v97 = vpop.f32.mrb[0].mxu0
    %v98 = vadd.f32 %v25, %v97
    %v99 = vpop.f32.mrb[0].mxu0
    %100 = vdwg.mxu0
    %vm101 = vcmask 64512
    %102 = vst.msk [vmem:[#allocation2] sm:$0xff] %vm101, %v98
    // Predicated region
    $region14: #{tpu_custom_call.1} parent=1 // pred_check
      _
    $region15: #{tpu_custom_call.1} parent=1 // pred_check_branch
      %104 = sbr.rel (0) target = $region17
    $region16: #{tpu_custom_call.1} parent=1 // pred_region
      %s106 = ssub.s32 128, 32
      %107 = vsyncadd [#allocation3], %s106
      %s108 = sshll.u32 [#allocation2], 4
      %s109 = int_to_ptr.vmem [resolvable:$true] %s108
      %114 = dma.vmem_to_hbm [thread:$0]  %s109, 32, %s3, [#allocation3], 32, 32, 2
    $region17: #{tpu_custom_call.1} parent=1 // pred_fallthru
      _
    // Predicated region
    $region18: #{tpu_custom_call.1} parent=1 // pred_check
      _
    $region19: #{tpu_custom_call.1} parent=1 // pred_check_branch
      %116 = sbr.rel (0) target = $region21
    $region20: #{tpu_custom_call.1} parent=1 // pred_region
      %117 = dma.done [#allocation3], 128
    $region21: #{tpu_custom_call.1} parent=1 // pred_fallthru
      _
    %118 = vsyncpa [#allocation3], 1

</llo_original>
